<compile_context>
chip_gen: v6e
topology: v6e:2x2x1
jax: 0.10.0
libtpu: 0.0.40
codegen_flags: <defaults>
</compile_context>

<pallas_src>
import functools

import jax
import jax.numpy as jnp
from jax.experimental import pallas as pl
from jax.experimental.pallas import tpu as pltpu


_MAX_PARTIALS = 2      # leading "parallel" grid axis (2 TensorCores on v7x)
_LANES = 128
_SUBLANES = 8
_F32_TEMPS = 4         # (tb, D) f32 elementwise temporaries budgeted in-kernel


def _round_up(x, m):
    return -(-x // m) * m


def _vmem_capacity_bytes():
    """Generation-aware VMEM capacity with a conservative (v7x) fallback."""
    try:
        info = pltpu.get_tpu_info()
        cap = getattr(info, "vmem_capacity_bytes", 0)
        if cap:
            return int(cap)
    except Exception:
        pass
    return 64 << 20


def _triplet_kernel(a_ref, p_ref, n_ref, o_ref, acc_ref, *, margin, total_b,
                    tb, tiles_per_partial, mask_rows):
    c = pl.program_id(0)   # partial-sum ("core") index     -- parallel
    i = pl.program_id(1)   # batch-tile index within partial -- arbitrary

    @pl.when(i == 0)
    def _init():
        acc_ref[...] = jnp.zeros_like(acc_ref)

    # Upcast in-kernel (inputs may be bf16 in HBM).  Difference-of-squares:
    #   ||a-p||^2 - ||a-n||^2 = sum((n - p) * (2a - p - n), axis=1)
    # -> a single cross-lane (XLU) reduction per row instead of two.
    p = p_ref[...].astype(jnp.float32)
    n = n_ref[...].astype(jnp.float32)
    d1 = n - p
    d2 = 2.0 * a_ref[...].astype(jnp.float32) - (p + n)
    delta = jnp.sum(d1 * d2, axis=1, keepdims=True)            # (tb, 1)

    losses = jnp.maximum(delta + margin, 0.0)                   # (tb, 1)

    if mask_rows:
        # Rows past the true batch size come from (partially/fully) OOB block
        # reads and are garbage; mask AFTER the relu so NaN/Inf never leaks.
        # Uses the *logical* (unclamped) block index, so clamped redundant
        # steps are fully zeroed.
        row = ((c * tiles_per_partial + i) * tb
               + jax.lax.broadcasted_iota(jnp.int32, losses.shape, 0))
        losses = jnp.where(row < total_b, losses, 0.0)

    acc_ref[...] += jnp.sum(losses, axis=0, keepdims=True)      # (1, 1)

    @pl.when(i == pl.num_programs(1) - 1)
    def _finalize():
        # Lane-dense output block: broadcast this partial's sum over (8, 128).
        o_ref[...] = jnp.broadcast_to(acc_ref[...], o_ref.shape)


def triplet_loss(anchor, positive, negative, margin=1.0, size_average=True,
                 block_b=8192):
    """Pallas TPU implementation of TripletLoss.forward. Returns a scalar f32."""
    assert anchor.shape == positive.shape == negative.shape
    assert anchor.ndim == 2
    B, D = anchor.shape
    itemsize = jnp.dtype(anchor.dtype).itemsize

    # ---- Generation-aware VMEM budget ------------------------------------
    vmem_cap = _vmem_capacity_bytes()
    vmem_limit = min(vmem_cap * 3 // 4, 100 << 20)   # ~48 MiB v7x, ~96 MiB v5e/v6e
    work_budget = vmem_cap * 5 // 8                  # ~40 MiB v7x, ~80 MiB v5e/v6e

    # Per-row VMEM cost: 3 inputs x 2 pipeline buffers (HBM dtype) plus the
    # in-kernel f32 upcast/elementwise temporaries; lane dim padded to 128 in
    # VMEM regardless of the true D.
    n_buf = 2
    d_vmem = max(_LANES, _round_up(D, _LANES))
    per_row = 3 * n_buf * d_vmem * itemsize + _F32_TEMPS * d_vmem * 4
    tb_cap = max(_SUBLANES, work_budget // per_row)

    tb = min(block_b, tb_cap, _round_up(B, _SUBLANES))
    tb = max(_SUBLANES, (tb // _SUBLANES) * _SUBLANES)

    tiles_total = -(-B // tb)
    num_partials = min(_MAX_PARTIALS, tiles_total)
    tiles_per_partial = -(-tiles_total // num_partials)
    grid_rows = num_partials * tiles_per_partial * tb
    mask_rows = grid_rows != B

    # Blocks are (tb, D): full feature dim (no wrapper-side padding -> no extra
    # HBM traffic).  Batch-edge blocks may overrun B (garbage reads, masked in
    # kernel).  Redundant grid steps (grid_rows > tiles_total*tb) clamp to the
    # last real block so no DMA starts beyond the array; they are fully masked.
    last_block = tiles_total - 1
    if num_partials * tiles_per_partial > tiles_total:
        def row_block(c, i):
            return (jnp.minimum(c * tiles_per_partial + i, last_block), 0)
    else:
        def row_block(c, i):
            return (c * tiles_per_partial + i, 0)

    in_spec = pl.BlockSpec((tb, D), row_block)
    # TODO(synk): if xprof shows exposed DMA in the small-D/many-step regime,
    # add pipeline_mode=pl.Buffered(3) here and fold the 3rd buffer into per_row.
    out_spec = pl.BlockSpec((_SUBLANES, _LANES), lambda c, i: (c, 0))

    kernel = functools.partial(
        _triplet_kernel,
        margin=float(margin),
        total_b=B,
        tb=tb,
        tiles_per_partial=tiles_per_partial,
        mask_rows=mask_rows,
    )

    out_bytes = num_partials * _SUBLANES * _LANES * 4
    cost = pl.CostEstimate(
        flops=6 * B * D,
        transcendentals=0,
        bytes_accessed=3 * B * D * itemsize + out_bytes,
    )

    partials = pl.pallas_call(
        kernel,
        out_shape=jax.ShapeDtypeStruct((num_partials * _SUBLANES, _LANES),
                                       jnp.float32),
        grid=(num_partials, tiles_per_partial),
        in_specs=[in_spec, in_spec, in_spec],
        out_specs=out_spec,
        scratch_shapes=[pltpu.VMEM((1, 1), jnp.float32)],
        compiler_params=pltpu.CompilerParams(
            dimension_semantics=("parallel", "arbitrary"),
            vmem_limit_bytes=int(vmem_limit),
        ),
        cost_estimate=cost,
    )(anchor, positive, negative)

    # One value per partial block (each (8,128) block is a broadcast of its sum).
    total = jnp.sum(partials[::_SUBLANES, 0])
    if size_average:
        total = total / B
    return total


def triplet_loss_ref(anchor, positive, negative, margin=1.0, size_average=True):
    """Pure-JAX reference for verification."""
    a = anchor.astype(jnp.float32)
    p = positive.astype(jnp.float32)
    n = negative.astype(jnp.float32)
    dp = jnp.sum((a - p) ** 2, axis=1)
    dn = jnp.sum((a - n) ** 2, axis=1)
    losses = jnp.maximum(dp - dn + margin, 0.0)
    return jnp.mean(losses) if size_average else jnp.sum(losses)


if __name__ == "__main__":
    key = jax.random.PRNGKey(0)
    keys = jax.random.split(key, 9)

    # Case 1: small batch, mean reduction, f32 inputs.
    B, D = 8, 32
    a = jax.random.normal(keys[0], (B, D), dtype=jnp.float32)
    p = jax.random.normal(keys[1], (B, D), dtype=jnp.float32)
    n = jax.random.normal(keys[2], (B, D), dtype=jnp.float32)
    out = jax.block_until_ready(
        triplet_loss(a, p, n, margin=1.0, size_average=True))
    ref = triplet_loss_ref(a, p, n, margin=1.0, size_average=True)
    assert jnp.allclose(out, ref, atol=1e-4, rtol=1e-5), (out, ref)

    # Case 2: ragged batch / non-128 feature dim, sum reduction, bf16 in HBM.
    B2, D2 = 13, 40
    a2 = jax.random.normal(keys[3], (B2, D2), dtype=jnp.bfloat16)
    p2 = jax.random.normal(keys[4], (B2, D2), dtype=jnp.bfloat16)
    n2 = jax.random.normal(keys[5], (B2, D2), dtype=jnp.bfloat16)
    out2 = jax.block_until_ready(
        triplet_loss(a2, p2, n2, margin=0.5, size_average=False))
    ref2 = triplet_loss_ref(a2, p2, n2, margin=0.5, size_average=False)
    assert jnp.allclose(out2, ref2, atol=1e-2, rtol=1e-2), (out2, ref2)

    # Case 3: force multi-tile / 2-partial / clamped-redundant-block path with
    # a small block_b so masking + index clamping are exercised at small shapes.
    B3, D3 = 50, 24
    a3 = jax.random.normal(keys[6], (B3, D3), dtype=jnp.float32)
    p3 = jax.random.normal(keys[7], (B3, D3), dtype=jnp.float32)
    n3 = jax.random.normal(keys[8], (B3, D3), dtype=jnp.float32)
    out3 = jax.block_until_ready(
        triplet_loss(a3, p3, n3, margin=1.0, size_average=True, block_b=8))
    ref3 = triplet_loss_ref(a3, p3, n3, margin=1.0, size_average=True)
    assert jnp.allclose(out3, ref3, atol=1e-4, rtol=1e-5), (out3, ref3)

    print("KERNEL_OK")
</pallas_src>

<mosaic_0001>
module attributes {stable_mosaic.version = 11 : i64} {
  func.func @_triplet_kernel(%arg0: i32, %arg1: i32, %arg2: memref<8x32xf32, #tpu.memory_space<vmem>>, %arg3: memref<8x32xf32, #tpu.memory_space<vmem>>, %arg4: memref<8x32xf32, #tpu.memory_space<vmem>>, %arg5: memref<8x128xf32, #tpu.memory_space<vmem>>, %arg6: memref<1x1xf32, #tpu.memory_space<vmem>>) attributes {dimension_semantics = [#tpu.dimension_semantics<parallel>, #tpu.dimension_semantics<arbitrary>], iteration_bounds = array<i64: 1, 1>, scalar_prefetch = 0 : i64, scratch_operands = 1 : i64, tpu.core_type = #tpu.core_type<tc>, window_params = [{transform_indices = @transform_0, window_bounds = array<i64: 8, 32>}, {transform_indices = @transform_1, window_bounds = array<i64: 8, 32>}, {transform_indices = @transform_2, window_bounds = array<i64: 8, 32>}, {transform_indices = @transform_3, window_bounds = array<i64: 8, 128>}]} {
    %c0_i32 = arith.constant 0 : i32
    %0 = arith.cmpi eq, %arg1, %c0_i32 : i32
    %1 = arith.extui %0 : i1 to i32
    %c0_i32_0 = arith.constant 0 : i32
    %2 = arith.cmpi ne, %1, %c0_i32_0 : i32
    scf.if %2 {
      %cst_16 = arith.constant 0.000000e+00 : f32
      %26 = vector.broadcast %cst_16 : f32 to vector<1x1xf32>
      %c0_17 = arith.constant 0 : index
      %c0_18 = arith.constant 0 : index
      %27 = vector.load %arg6[%c0_17, %c0_18] : memref<1x1xf32, #tpu.memory_space<vmem>>, vector<1x1xf32>
      tpu.vector_store %arg6[%c0_17, %c0_18], %26 {strides = array<i32>} : memref<1x1xf32, #tpu.memory_space<vmem>>, vector<1x1xf32>,
    } else {
    }
    %c0 = arith.constant 0 : index
    %c0_1 = arith.constant 0 : index
    %3 = vector.load %arg3[%c0, %c0_1] : memref<8x32xf32, #tpu.memory_space<vmem>>, vector<8x32xf32>
    %c0_2 = arith.constant 0 : index
    %c0_3 = arith.constant 0 : index
    %4 = vector.load %arg4[%c0_2, %c0_3] : memref<8x32xf32, #tpu.memory_space<vmem>>, vector<8x32xf32>
    %5 = arith.subf %4, %3 : vector<8x32xf32>
    %c0_4 = arith.constant 0 : index
    %c0_5 = arith.constant 0 : index
    %6 = vector.load %arg2[%c0_4, %c0_5] : memref<8x32xf32, #tpu.memory_space<vmem>>, vector<8x32xf32>
    %cst = arith.constant 2.000000e+00 : f32
    %7 = vector.broadcast %cst : f32 to vector<8x32xf32>
    %8 = arith.mulf %7, %6 : vector<8x32xf32>
    %9 = arith.addf %3, %4 : vector<8x32xf32>
    %10 = arith.subf %8, %9 : vector<8x32xf32>
    %11 = arith.mulf %5, %10 : vector<8x32xf32>
    %cst_6 = arith.constant dense<0.000000e+00> : vector<8xf32>
    %12 = vector.multi_reduction <add>, %11, %cst_6 [1] : vector<8x32xf32> to vector<8xf32>
    %13 = vector.shape_cast %12 : vector<8xf32> to vector<8x1xf32>
    %cst_7 = arith.constant 1.000000e+00 : f32
    %14 = vector.broadcast %cst_7 : f32 to vector<8x1xf32>
    %15 = arith.addf %13, %14 : vector<8x1xf32>
    %cst_8 = arith.constant 0.000000e+00 : f32
    %16 = vector.broadcast %cst_8 : f32 to vector<8x1xf32>
    %17 = arith.maximumf %15, %16 : vector<8x1xf32>
    %c0_9 = arith.constant 0 : index
    %c0_10 = arith.constant 0 : index
    %18 = vector.load %arg6[%c0_9, %c0_10] : memref<1x1xf32, #tpu.memory_space<vmem>>, vector<1x1xf32>
    %cst_11 = arith.constant dense<0.000000e+00> : vector<1xf32>
    %19 = vector.multi_reduction <add>, %17, %cst_11 [0] : vector<8x1xf32> to vector<1xf32>
    %20 = vector.shape_cast %19 : vector<1xf32> to vector<1x1xf32>
    %21 = arith.addf %18, %20 : vector<1x1xf32>
    %c0_12 = arith.constant 0 : index
    %c0_13 = arith.constant 0 : index
    %22 = vector.load %arg6[%c0_12, %c0_13] : memref<1x1xf32, #tpu.memory_space<vmem>>, vector<1x1xf32>
    tpu.vector_store %arg6[%c0_12, %c0_13], %21 {strides = array<i32>} : memref<1x1xf32, #tpu.memory_space<vmem>>, vector<1x1xf32>,
    %c0_i32_14 = arith.constant 0 : i32
    %23 = arith.cmpi eq, %arg1, %c0_i32_14 : i32
    %24 = arith.extui %23 : i1 to i32
    %c0_i32_15 = arith.constant 0 : i32
    %25 = arith.cmpi ne, %24, %c0_i32_15 : i32
    scf.if %25 {
      %c0_16 = arith.constant 0 : index
      %c0_17 = arith.constant 0 : index
      %26 = vector.load %arg6[%c0_16, %c0_17] : memref<1x1xf32, #tpu.memory_space<vmem>>, vector<1x1xf32>
      %27 = vector.shape_cast %26 : vector<1x1xf32> to vector<1x1xf32>
      %28 = vector.broadcast %27 : vector<1x1xf32> to vector<8x128xf32>
      %c0_18 = arith.constant 0 : index
      %c0_19 = arith.constant 0 : index
      %29 = vector.load %arg5[%c0_18, %c0_19] : memref<8x128xf32, #tpu.memory_space<vmem>>, vector<8x128xf32>
      tpu.vector_store %arg5[%c0_18, %c0_19], %28 {strides = array<i32>} : memref<8x128xf32, #tpu.memory_space<vmem>>, vector<8x128xf32>,
    } else {
    }
    return
  }
  func.func @transform_0(%arg0: i32, %arg1: i32) -> (i32, i32) {
    %c1_i32 = arith.constant 1 : i32
    %0 = arith.muli %arg0, %c1_i32 : i32
    %1 = arith.addi %0, %arg1 : i32
    %c0_i32 = arith.constant 0 : i32
    %c0_i32_0 = arith.constant 0 : i32
    return %1, %c0_i32 : i32, i32
  }
  func.func @transform_1(%arg0: i32, %arg1: i32) -> (i32, i32) {
    %c1_i32 = arith.constant 1 : i32
    %0 = arith.muli %arg0, %c1_i32 : i32
    %1 = arith.addi %0, %arg1 : i32
    %c0_i32 = arith.constant 0 : i32
    %c0_i32_0 = arith.constant 0 : i32
    return %1, %c0_i32 : i32, i32
  }
  func.func @transform_2(%arg0: i32, %arg1: i32) -> (i32, i32) {
    %c1_i32 = arith.constant 1 : i32
    %0 = arith.muli %arg0, %c1_i32 : i32
    %1 = arith.addi %0, %arg1 : i32
    %c0_i32 = arith.constant 0 : i32
    %c0_i32_0 = arith.constant 0 : i32
    return %1, %c0_i32 : i32, i32
  }
  func.func @transform_3(%arg0: i32, %arg1: i32) -> (i32, i32) {
    %c0_i32 = arith.constant 0 : i32
    %c0_i32_0 = arith.constant 0 : i32
    return %arg0, %c0_i32 : i32, i32
  }
}

</mosaic_0001>

<llo_original>
// kernel: tpu_custom_call.1
$region0: #{tpu_custom_call.1}
  #allocation0 [shape = 'u32[]', space=smem, size = 0x4, offset = 0x4, fixed_abs, tag = 'smem constant byte address 0x4 - core index']
  #allocation1 [shape = 'u32[144,128]{1,0:T(1,128)}', space=vmem, size = 0x12000, scoped, tag = 'internal scratch']
  #allocation2 [shape = 'f32[1,1]{1,0:T(1,128)}', space=vmem, size = 0x200, scoped, tag = 'scratch operand']
  %s0 = inlined_call_operand.hbm [shape: f32[8,32], index: 0, kind: input, shape index: {}]
  %s1 = inlined_call_operand.hbm [shape: f32[8,32], index: 1, kind: input, shape index: {}]
  %s2 = inlined_call_operand.hbm [shape: f32[8,32], index: 2, kind: input, shape index: {}]
  %s3 = inlined_call_operand.hbm [shape: f32[8,128], index: 3, kind: output, shape index: {}]
  %s4 = sld [smem:[#allocation0]]
  $region42: #{tpu_custom_call.1} parent=0
    _
  %s6 = ssub.s32 1, %s4
  %s7 = scalar_select 0, %s6, %s4
  $region1: #{tpu_custom_call.1} parent=0
    #allocation3 [shape = 'u8[4096]{0}', space=vmem, size = 0x1000, scoped, tag = 'input window, operand 0, single buffered']
    #allocation4 [shape = 's32[1]{0}', space=sflag, size = 0x4, scoped, tag = 'scoped memory for tpu_custom_call.1']
    #allocation5 [shape = 's32[1]{0}', space=sflag, size = 0x4, scoped, tag = 'scoped memory for tpu_custom_call.1']
    #allocation6 [shape = 'u8[4096]{0}', space=vmem, size = 0x1000, scoped, tag = 'input window, operand 1, single buffered']
    #allocation7 [shape = 's32[1]{0}', space=sflag, size = 0x4, scoped, tag = 'scoped memory for tpu_custom_call.1']
    #allocation8 [shape = 'u8[4096]{0}', space=vmem, size = 0x1000, scoped, tag = 'input window, operand 2, single buffered']
    #allocation9 [shape = 'u8[4096]{0}', space=vmem, size = 0x1000, scoped, tag = 'output window, operand 0, single buffered']
    %8 = vsyncpa [#allocation4], 0
    %9 = vsyncpa [#allocation7], 0
    %10 = vsyncpa [#allocation5], 0
    // Predicated region
    $region2: #{tpu_custom_call.1} parent=1 // pred_check
      _
    $region3: #{tpu_custom_call.1} parent=1 // pred_check_branch
      %12 = sbr.rel (0) target = $region5
    $region4: #{tpu_custom_call.1} parent=1 // pred_region
      %s13 = sadd.s32 0, 0
      %s15 = ssub.s32 128, 128
      %16 = vsyncadd [#allocation4], %s15
      %s17 = smul.addr %s13, 128
      %s18 = scalar_lea.hbm %s0, %s17
      %s20 = sshll.u32 [#allocation3], 4
      %s21 = int_to_ptr.vmem [resolvable:$true] %s20
      %23 = dma.hbm_to_vmem [thread:$0]  %s18, 128, %s21, [#allocation4]
    $region5: #{tpu_custom_call.1} parent=1 // pred_fallthru
      _
    // Predicated region
    $region6: #{tpu_custom_call.1} parent=1 // pred_check
      _
    $region7: #{tpu_custom_call.1} parent=1 // pred_check_branch
      %25 = sbr.rel (0) target = $region9
    $region8: #{tpu_custom_call.1} parent=1 // pred_region
      %s26 = sadd.s32 0, 0
      %s28 = ssub.s32 128, 128
      %29 = vsyncadd [#allocation7], %s28
      %s30 = smul.addr %s26, 128
      %s31 = scalar_lea.hbm %s1, %s30
      %s33 = sshll.u32 [#allocation6], 4
      %s34 = int_to_ptr.vmem [resolvable:$true] %s33
      %36 = dma.hbm_to_vmem [thread:$0]  %s31, 128, %s34, [#allocation7]
    $region9: #{tpu_custom_call.1} parent=1 // pred_fallthru
      _
    // Predicated region
    $region10: #{tpu_custom_call.1} parent=1 // pred_check
      _
    $region11: #{tpu_custom_call.1} parent=1 // pred_check_branch
      %38 = sbr.rel (0) target = $region13
    $region12: #{tpu_custom_call.1} parent=1 // pred_region
      %s39 = sadd.s32 0, 0
      %s41 = ssub.s32 128, 128
      %42 = vsyncadd [#allocation7], %s41
      %s43 = smul.addr %s39, 128
      %s44 = scalar_lea.hbm %s2, %s43
      %s46 = sshll.u32 [#allocation8], 4
      %s47 = int_to_ptr.vmem [resolvable:$true] %s46
      %49 = dma.hbm_to_vmem [thread:$0]  %s44, 128, %s47, [#allocation7]
    $region13: #{tpu_custom_call.1} parent=1 // pred_fallthru
      _
    // Predicated region
    $region14: #{tpu_custom_call.1} parent=1 // pred_check
      _
    $region15: #{tpu_custom_call.1} parent=1 // pred_check_branch
      %51 = sbr.rel (0) target = $region17
    $region16: #{tpu_custom_call.1} parent=1 // pred_region
      %52 = dma.done [#allocation4], 128
    $region17: #{tpu_custom_call.1} parent=1 // pred_fallthru
      _
    // Predicated region
    $region18: #{tpu_custom_call.1} parent=1 // pred_check
      _
    $region19: #{tpu_custom_call.1} parent=1 // pred_check_branch
      %54 = sbr.rel (0) target = $region21
    $region20: #{tpu_custom_call.1} parent=1 // pred_region
      %55 = dma.done [#allocation7], 128
    $region21: #{tpu_custom_call.1} parent=1 // pred_fallthru
      _
    // Predicated region
    $region22: #{tpu_custom_call.1} parent=1 // pred_check
      _
    $region23: #{tpu_custom_call.1} parent=1 // pred_check_branch
      %57 = sbr.rel (0) target = $region25
    $region24: #{tpu_custom_call.1} parent=1 // pred_region
      %58 = dma.done [#allocation7], 128
    $region25: #{tpu_custom_call.1} parent=1 // pred_fallthru
      _
    %s59 = sadd.s32 0, 0
    %s60 = sadd.s32 0, 0
    %s61 = sadd.s32 0, 0
    %p62 = scmp.eq.s32.totalorder 0, 0
    // Predicated region
    $region26: #{tpu_custom_call.1} parent=1 // pred_check
      %p63 = pneg %p62
    $region27: #{tpu_custom_call.1} parent=1 // pred_check_branch
      %65 = sbr.rel (%p63) target = $region29
    $region28: #{tpu_custom_call.1} parent=1 // pred_region
      %vm66 = vcmask 0
      %67 = vst.msk [vmem:[#allocation2] sm:$0x1] %vm66, 0.0
    $region29: #{tpu_custom_call.1} parent=1 // pred_fallthru
      _
    %v68 = vld [vmem:[#allocation6] sm:$0xff]
    %v69 = vld [vmem:[#allocation8] sm:$0xff]
    %v70 = vsub.f32 %v69, %v68
    %v71 = vld [vmem:[#allocation3] sm:$0xff]
    %v72 = vmul.f32 %v71, 2.0
    %v73 = vadd.f32 %v68, %v69
    %v74 = vsub.f32 %v72, %v73
    %v75 = vmul.f32 %v70, %v74
    %vm76 = vcmask 261120
    %v77 = vsel %vm76, %v75, 0.0
    %78 = vadd.xlane.f32.xlu0 %v77
    %v79 = vpop.xlane.xlu0 %78
    %v80 = vadd.f32 %v79, 1.0
    %v81 = vmax.f32 %v80, 0.0
    %v82 = vld [vmem:[#allocation2] sm:$0x1]
    %v83 = vrot.slane %v81, 4
    %v84 = vadd.f32 %v81, %v83
    %v85 = vrot.slane %v84, 2
    %v86 = vadd.f32 %v84, %v85
    %v87 = vrot.slane %v86, 1
    %v88 = vadd.f32 %v86, %v87
    %v89 = vadd.f32 %v82, %v88
    %vm90 = vcmask 0
    %91 = vst.msk [vmem:[#allocation2] sm:$0x1] %vm90, %v89
    // Predicated region
    $region30: #{tpu_custom_call.1} parent=1 // pred_check
      %p92 = pneg %p62
    $region31: #{tpu_custom_call.1} parent=1 // pred_check_branch
      %94 = sbr.rel (%p92) target = $region33
    $region32: #{tpu_custom_call.1} parent=1 // pred_region
      %v95 = vld [vmem:[#allocation2] sm:$0x1]
      %v97 = vlaneseq
      %v98 = vshrl.u32 %v97, 7
      %v99 = vsub.s32 0, %v98
      %v100 = vrot.slane %v95, %v99
      %101 = vset.pattern.permute.xlu0 0
      %102 = vperm.xlu0 %101, %v100
      %v103 = vpop.permute.xlu0 %102
      %105 = vst [vmem:[#allocation9] sm:$0xff] %v103
    $region33: #{tpu_custom_call.1} parent=1 // pred_fallthru
      _
    // Predicated region
    $region34: #{tpu_custom_call.1} parent=1 // pred_check
      _
    $region35: #{tpu_custom_call.1} parent=1 // pred_check_branch
      %107 = sbr.rel (0) target = $region37
    $region36: #{tpu_custom_call.1} parent=1 // pred_region
      %s109 = ssub.s32 128, 128
      %110 = vsyncadd [#allocation5], %s109
      %s112 = sshll.u32 [#allocation9], 4
      %s113 = int_to_ptr.vmem [resolvable:$true] %s112
      %115 = dma.vmem_to_hbm [thread:$0]  %s113, 128, %s3, [#allocation5]
    $region37: #{tpu_custom_call.1} parent=1 // pred_fallthru
      _
    // Predicated region
    $region38: #{tpu_custom_call.1} parent=1 // pred_check
      _
    $region39: #{tpu_custom_call.1} parent=1 // pred_check_branch
      %117 = sbr.rel (0) target = $region41
    $region40: #{tpu_custom_call.1} parent=1 // pred_region
      %118 = dma.done [#allocation5], 128
    $region41: #{tpu_custom_call.1} parent=1 // pred_fallthru
      _
    %119 = vsyncpa [#allocation4], 1
    %120 = vsyncpa [#allocation7], 1
    %121 = vsyncpa [#allocation5], 1

</llo_original>
